<compile_context>
chip_gen: v7x
topology: tpu7x:2x2x1
jax: 0.10.0
libtpu: 0.0.40
codegen_flags: <defaults>
</compile_context>

<pallas_src>
import numpy as np
import jax
import jax.numpy as jnp
from jax.experimental import pallas as pl
from jax.experimental.pallas import tpu as pltpu

D_MODEL = 512          # forced by the `/ 512` and torch.cat in the PyTorch __init__
MAX_SEQ_LEN = 128      # rows of the sinusoidal table
MAX_LEN = 12           # hard-coded in the PyTorch forward


def build_sinusoid_table():
    """(128, 512) float32 sinusoidal rows, identical to the PyTorch __init__ (before pad row)."""
    pos = np.arange(MAX_SEQ_LEN, dtype=np.float64)[:, None]           # (128, 1)
    j = np.arange(D_MODEL, dtype=np.float64)[None, :]                 # (1, 512)
    pe = pos / np.power(10000.0, 2.0 * np.floor(j / 2.0) / 512.0)     # (128, 512)
    pe[:, 0::2] = np.sin(pe[:, 0::2])
    pe[:, 1::2] = np.cos(pe[:, 1::2])
    return jnp.asarray(pe, dtype=jnp.float32)


def build_full_embedding_table():
    """(129, 512) float32: zero pad row + sinusoidal rows (the PyTorch embedding weight)."""
    sin = np.asarray(build_sinusoid_table(), dtype=np.float32)
    return jnp.asarray(np.concatenate([np.zeros((1, D_MODEL), np.float32), sin], axis=0))


def pe_onehot_gather_kernel(pos_ref, table_ref, o_ref):
    """One grid step: gather R embedding rows via a one-hot MXU matmul.

    pos_ref   : VMEM (R, 1)   int32 -- position ids (0 = pad) for the R output rows
    table_ref : VMEM (128, D) f32   -- sinusoidal table (row k == position id k + 1)
    o_ref     : VMEM (R, D)   f32   -- sublane/lane-dense output slab
    """
    r = o_ref.shape[0]
    v = table_ref.shape[0]
    pos = pos_ref[...]                                          # (R, 1) int32
    col = jax.lax.broadcasted_iota(jnp.int32, (r, v), 1)        # (R, V)
    # pos == 0 matches no column -> all-zero one-hot row == the pad row, for free.
    onehot = (col == (pos - 1)).astype(jnp.float32)             # (R, V) f32
    o_ref[...] = jnp.dot(onehot, table_ref[...],
                         preferred_element_type=jnp.float32)    # one MXU op + one dense store


def positional_encoding(input_lens, sin_table, max_len=MAX_LEN, batch_block=2):
    """JAX wrapper: build input_pos (glue, like the PyTorch list comprehension), run the kernel."""
    B = int(input_lens.shape[0])
    V, D = sin_table.shape
    R = batch_block * max_len                     # rows per grid step (24 for batch_block=2)
    assert R % 8 == 0, "rows per grid step must be a multiple of 8 (sublane-dense output block)"

    steps = jnp.arange(1, max_len + 1, dtype=jnp.int32)[None, :]        # (1, T)
    lens = input_lens.astype(jnp.int32)[:, None]                        # (B, 1)
    input_pos = jnp.where(steps <= lens, steps, 0).astype(jnp.int32)    # (B, T): [1..L], 0-padded

    # Pad the batch so every grid step owns exactly batch_block batch rows.
    n_blocks = -(-B // batch_block)
    Bp = n_blocks * batch_block
    if Bp != B:
        input_pos = jnp.concatenate(
            [input_pos, jnp.zeros((Bp - B, max_len), jnp.int32)], axis=0)
    pos_flat = input_pos.reshape(Bp * max_len, 1)                       # (Bp*T, 1)

    out_flat = pl.pallas_call(
        pe_onehot_gather_kernel,
        out_shape=jax.ShapeDtypeStruct((Bp * max_len, D), jnp.float32),
        grid=(n_blocks,),
        in_specs=[
            pl.BlockSpec((R, 1), lambda i: (i, 0)),   # positions for this slab
            pl.BlockSpec((V, D), lambda i: (0, 0)),   # table: constant block index -> DMA'd once
        ],
        out_specs=pl.BlockSpec((R, D), lambda i: (i, 0)),
        compiler_params=pltpu.CompilerParams(
            dimension_semantics=("parallel",)),       # v7x: shards grid steps across both TCs
    )(pos_flat, sin_table)

    return out_flat.reshape(Bp, max_len, D)[:B]


if __name__ == "__main__":
    key = jax.random.PRNGKey(0)

    full_table = build_full_embedding_table()   # (129, 512): the PyTorch embedding weight
    sin_table = full_table[1:]                  # (128, 512): what the kernel consumes

    def reference(lens):
        steps = jnp.arange(1, MAX_LEN + 1, dtype=jnp.int32)[None, :]
        pos = jnp.where(steps <= lens.astype(jnp.int32)[:, None], steps, 0)
        return jnp.take(full_table, pos, axis=0)            # (B, 12, 512)

    # Primary check: B=2 (whole batch in one grid step).
    B = 2
    input_lens = jax.random.randint(key, (B,), 1, MAX_LEN + 1).astype(jnp.int32)
    out = jax.block_until_ready(positional_encoding(input_lens, sin_table))
    assert out.shape == (B, MAX_LEN, D_MODEL), out.shape
    assert out.dtype == jnp.float32, out.dtype
    np.testing.assert_allclose(np.asarray(out), np.asarray(reference(input_lens)),
                               rtol=0.0, atol=3e-5)

    # Second check: odd batch -> exercises batch padding and a multi-step "parallel" grid.
    B2 = 5
    key2 = jax.random.fold_in(key, 1)
    input_lens2 = jax.random.randint(key2, (B2,), 1, MAX_LEN + 1).astype(jnp.int32)
    out2 = jax.block_until_ready(positional_encoding(input_lens2, sin_table))
    assert out2.shape == (B2, MAX_LEN, D_MODEL), out2.shape
    np.testing.assert_allclose(np.asarray(out2), np.asarray(reference(input_lens2)),
                               rtol=0.0, atol=3e-5)

    print("KERNEL_OK")
</pallas_src>

<mosaic_0001>
module attributes {stable_mosaic.version = 11 : i64} {
  func.func @pe_onehot_gather_kernel(%arg0: i32, %arg1: memref<24x1xi32, #tpu.memory_space<vmem>>, %arg2: memref<128x512xf32, #tpu.memory_space<vmem>>, %arg3: memref<24x512xf32, #tpu.memory_space<vmem>>) attributes {dimension_semantics = [#tpu.dimension_semantics<parallel>], iteration_bounds = array<i64: 1>, scalar_prefetch = 0 : i64, scratch_operands = 0 : i64, tpu.core_type = #tpu.core_type<tc>, window_params = [{transform_indices = @transform_0, window_bounds = array<i64: 24, 1>}, {pipeline_mode = #tpu.pipeline_mode<synchronous>, transform_indices = @transform_1, window_bounds = array<i64: 128, 512>}, {transform_indices = @transform_2, window_bounds = array<i64: 24, 512>}]} {
    %c0 = arith.constant 0 : index
    %c0_0 = arith.constant 0 : index
    %0 = vector.load %arg1[%c0, %c0_0] : memref<24x1xi32, #tpu.memory_space<vmem>>, vector<24x1xi32>
    %1 = tpu.iota {dimensions = array<i32: 1>} : vector<24x128xi32>
    %c1_i32 = arith.constant 1 : i32
    %2 = vector.broadcast %c1_i32 : i32 to vector<24x1xi32>
    %3 = arith.subi %0, %2 : vector<24x1xi32>
    %4 = vector.broadcast %3 : vector<24x1xi32> to vector<24x128xi32>
    %5 = arith.cmpi eq, %1, %4 : vector<24x128xi32>
    %6 = arith.extui %5 : vector<24x128xi1> to vector<24x128xi32>
    %7 = arith.sitofp %6 : vector<24x128xi32> to vector<24x128xf32>
    %c0_1 = arith.constant 0 : index
    %c0_2 = arith.constant 0 : index
    %8 = vector.load %arg2[%c0_1, %c0_2] : memref<128x512xf32, #tpu.memory_space<vmem>>, vector<128x512xf32>
    %cst = arith.constant dense<0.000000e+00> : vector<24x512xf32>
    %9 = tpu.matmul %7, %8, %cst {dimension_numbers = #tpu.dot_dimension_numbers<[1], [0], [0], [1], [0, 0, 1, 1], [], []>} : vector<24x128xf32>, vector<128x512xf32>, vector<24x512xf32> -> vector<24x512xf32>
    %c0_3 = arith.constant 0 : index
    %c0_4 = arith.constant 0 : index
    %10 = vector.load %arg3[%c0_3, %c0_4] : memref<24x512xf32, #tpu.memory_space<vmem>>, vector<24x512xf32>
    tpu.vector_store %arg3[%c0_3, %c0_4], %9 {strides = array<i32>} : memref<24x512xf32, #tpu.memory_space<vmem>>, vector<24x512xf32>,
    return
  }
  func.func @transform_0(%arg0: i32) -> (i32, i32) {
    %c0_i32 = arith.constant 0 : i32
    %c0_i32_0 = arith.constant 0 : i32
    return %arg0, %c0_i32 : i32, i32
  }
  func.func @transform_1(%arg0: i32) -> (i32, i32) {
    %c0_i32 = arith.constant 0 : i32
    %c0_i32_0 = arith.constant 0 : i32
    %c0_i32_1 = arith.constant 0 : i32
    return %c0_i32, %c0_i32_0 : i32, i32
  }
  func.func @transform_2(%arg0: i32) -> (i32, i32) {
    %c0_i32 = arith.constant 0 : i32
    %c0_i32_0 = arith.constant 0 : i32
    return %arg0, %c0_i32 : i32, i32
  }
}

</mosaic_0001>

<llo_original>
// kernel: tpu_custom_call.1
$region0: #{tpu_custom_call.1}
  #allocation0 [shape = 'u32[]', space=smem, size = 0x4, offset = 0x4, fixed_abs, tag = 'smem constant byte address 0x4 - core index']
  #allocation1 [shape = 'u32[144,128]{1,0:T(1,128)}', space=vmem, size = 0x12000, scoped, tag = 'internal scratch']
  %s0 = inlined_call_operand.vmem [shape: s32[24,1], index: 0, kind: input, shape index: {}]
  %s1 = inlined_call_operand.hbm [shape: f32[128,512], index: 1, kind: input, shape index: {}]
  %s2 = inlined_call_operand.hbm [shape: f32[24,512], index: 2, kind: output, shape index: {}]
  %s3 = sld [smem:[#allocation0]]
  $region22: #{tpu_custom_call.1} parent=0
    _
  %s5 = ssub.s32 1, %s3
  %s6 = scalar_select 0, %s5, %s3
  $region1: #{tpu_custom_call.1} parent=0
    #allocation2 [shape = 'u8[262144]{0}', space=vmem, size = 0x40000, scoped, tag = 'input window, operand 1, single buffered']
    #allocation3 [shape = 's32[1]{0}', space=sflag, size = 0x4, scoped, tag = 'scoped memory for tpu_custom_call.1']
    #allocation4 [shape = 's32[1]{0}', space=sflag, size = 0x4, scoped, tag = 'scoped memory for tpu_custom_call.1']
    #allocation5 [shape = 'u8[49152]{0}', space=vmem, size = 0xc000, scoped, tag = 'output window, operand 0, single buffered']
    %7 = vsyncpa [#allocation3], 0
    %8 = vsyncpa [#allocation4], 0
    // Predicated region
    $region2: #{tpu_custom_call.1} parent=1 // pred_check
      _
    $region3: #{tpu_custom_call.1} parent=1 // pred_check_branch
      %10 = sbr.rel (0) target = $region5
    $region4: #{tpu_custom_call.1} parent=1 // pred_region
      _
    $region5: #{tpu_custom_call.1} parent=1 // pred_fallthru
      _
    // Predicated region
    $region6: #{tpu_custom_call.1} parent=1 // pred_check
      _
    $region7: #{tpu_custom_call.1} parent=1 // pred_check_branch
      %12 = sbr.rel (0) target = $region9
    $region8: #{tpu_custom_call.1} parent=1 // pred_region
      %s14 = ssub.s32 8192, 8192
      %15 = vsyncadd [#allocation3], %s14
      %s16 = sshll.u32 [#allocation2], 4
      %s17 = int_to_ptr.vmem [resolvable:$true] %s16
      %22 = dma.hbm_to_vmem [thread:$0]  %s1, 8192, %s17, [#allocation3], 512, 512, 32
    $region9: #{tpu_custom_call.1} parent=1 // pred_fallthru
      _
    // Predicated region
    $region10: #{tpu_custom_call.1} parent=1 // pred_check
      _
    $region11: #{tpu_custom_call.1} parent=1 // pred_check_branch
      %24 = sbr.rel (0) target = $region13
    $region12: #{tpu_custom_call.1} parent=1 // pred_region
      %25 = dma.done [#allocation3], 8192
    $region13: #{tpu_custom_call.1} parent=1 // pred_fallthru
      _
    %v26 = vld [vmem:[%s0] sm:$0xff]
    %v27 = vld [vmem:[%s0 + $0x8] sm:$0xff]
    %v28 = vld [vmem:[%s0 + $0x10] sm:$0xff]
    %v29 = vlaneseq
    %v30 = vand.u32 %v29, 127
    %v31 = vsub.s32 %v26, 1
    %v32 = vsub.s32 %v27, 1
    %v33 = vsub.s32 %v28, 1
    %34 = vset.pattern.permute.xlu0 0
    %35 = vperm.xlu0 %34, %v31
    %v36 = vpop.permute.xlu0 %35
    %37 = vset.pattern.permute.xlu0 0
    %38 = vperm.xlu0 %37, %v32
    %v39 = vpop.permute.xlu0 %38
    %40 = vset.pattern.permute.xlu0 0
    %41 = vperm.xlu0 %40, %v33
    %v42 = vpop.permute.xlu0 %41
    %vm43 = vcmp.eq.s32.totalorder %v30, %v36
    %vm44 = vcmp.eq.s32.totalorder %v30, %v39
    %vm45 = vcmp.eq.s32.totalorder %v30, %v42
    %v46 = vsel %vm43, 1, 0
    %v47 = vsel %vm44, 1, 0
    %v48 = vsel %vm45, 1, 0
    %v49 = vcvt.s32.f32 %v46
    %v50 = vcvt.s32.f32 %v47
    %v51 = vcvt.s32.f32 %v48
    %v52 = vld [vmem:[#allocation2] sm:$0xff]
    %v53 = vld [vmem:[#allocation2 + $0x8] sm:$0xff]
    %v54 = vld [vmem:[#allocation2 + $0x10] sm:$0xff]
    %v55 = vld [vmem:[#allocation2 + $0x18] sm:$0xff]
    %v56 = vld [vmem:[#allocation2 + $0x20] sm:$0xff]
    %v57 = vld [vmem:[#allocation2 + $0x28] sm:$0xff]
    %v58 = vld [vmem:[#allocation2 + $0x30] sm:$0xff]
    %v59 = vld [vmem:[#allocation2 + $0x38] sm:$0xff]
    %v60 = vld [vmem:[#allocation2 + $0x40] sm:$0xff]
    %v61 = vld [vmem:[#allocation2 + $0x48] sm:$0xff]
    %v62 = vld [vmem:[#allocation2 + $0x50] sm:$0xff]
    %v63 = vld [vmem:[#allocation2 + $0x58] sm:$0xff]
    %v64 = vld [vmem:[#allocation2 + $0x60] sm:$0xff]
    %v65 = vld [vmem:[#allocation2 + $0x68] sm:$0xff]
    %v66 = vld [vmem:[#allocation2 + $0x70] sm:$0xff]
    %v67 = vld [vmem:[#allocation2 + $0x78] sm:$0xff]
    %v68 = vld [vmem:[#allocation2 + $0x80] sm:$0xff]
    %v69 = vld [vmem:[#allocation2 + $0x88] sm:$0xff]
    %v70 = vld [vmem:[#allocation2 + $0x90] sm:$0xff]
    %v71 = vld [vmem:[#allocation2 + $0x98] sm:$0xff]
    %v72 = vld [vmem:[#allocation2 + $0xa0] sm:$0xff]
    %v73 = vld [vmem:[#allocation2 + $0xa8] sm:$0xff]
    %v74 = vld [vmem:[#allocation2 + $0xb0] sm:$0xff]
    %v75 = vld [vmem:[#allocation2 + $0xb8] sm:$0xff]
    %v76 = vld [vmem:[#allocation2 + $0xc0] sm:$0xff]
    %v77 = vld [vmem:[#allocation2 + $0xc8] sm:$0xff]
    %v78 = vld [vmem:[#allocation2 + $0xd0] sm:$0xff]
    %v79 = vld [vmem:[#allocation2 + $0xd8] sm:$0xff]
    %v80 = vld [vmem:[#allocation2 + $0xe0] sm:$0xff]
    %v81 = vld [vmem:[#allocation2 + $0xe8] sm:$0xff]
    %v82 = vld [vmem:[#allocation2 + $0xf0] sm:$0xff]
    %v83 = vld [vmem:[#allocation2 + $0xf8] sm:$0xff]
    %v84 = vld [vmem:[#allocation2 + $0x100] sm:$0xff]
    %v85 = vld [vmem:[#allocation2 + $0x108] sm:$0xff]
    %v86 = vld [vmem:[#allocation2 + $0x110] sm:$0xff]
    %v87 = vld [vmem:[#allocation2 + $0x118] sm:$0xff]
    %v88 = vld [vmem:[#allocation2 + $0x120] sm:$0xff]
    %v89 = vld [vmem:[#allocation2 + $0x128] sm:$0xff]
    %v90 = vld [vmem:[#allocation2 + $0x130] sm:$0xff]
    %v91 = vld [vmem:[#allocation2 + $0x138] sm:$0xff]
    %v92 = vld [vmem:[#allocation2 + $0x140] sm:$0xff]
    %v93 = vld [vmem:[#allocation2 + $0x148] sm:$0xff]
    %v94 = vld [vmem:[#allocation2 + $0x150] sm:$0xff]
    %v95 = vld [vmem:[#allocation2 + $0x158] sm:$0xff]
    %v96 = vld [vmem:[#allocation2 + $0x160] sm:$0xff]
    %v97 = vld [vmem:[#allocation2 + $0x168] sm:$0xff]
    %v98 = vld [vmem:[#allocation2 + $0x170] sm:$0xff]
    %v99 = vld [vmem:[#allocation2 + $0x178] sm:$0xff]
    %v100 = vld [vmem:[#allocation2 + $0x180] sm:$0xff]
    %v101 = vld [vmem:[#allocation2 + $0x188] sm:$0xff]
    %v102 = vld [vmem:[#allocation2 + $0x190] sm:$0xff]
    %v103 = vld [vmem:[#allocation2 + $0x198] sm:$0xff]
    %v104 = vld [vmem:[#allocation2 + $0x1a0] sm:$0xff]
    %v105 = vld [vmem:[#allocation2 + $0x1a8] sm:$0xff]
    %v106 = vld [vmem:[#allocation2 + $0x1b0] sm:$0xff]
    %v107 = vld [vmem:[#allocation2 + $0x1b8] sm:$0xff]
    %v108 = vld [vmem:[#allocation2 + $0x1c0] sm:$0xff]
    %v109 = vld [vmem:[#allocation2 + $0x1c8] sm:$0xff]
    %v110 = vld [vmem:[#allocation2 + $0x1d0] sm:$0xff]
    %v111 = vld [vmem:[#allocation2 + $0x1d8] sm:$0xff]
    %v112 = vld [vmem:[#allocation2 + $0x1e0] sm:$0xff]
    %v113 = vld [vmem:[#allocation2 + $0x1e8] sm:$0xff]
    %v114 = vld [vmem:[#allocation2 + $0x1f0] sm:$0xff]
    %v115 = vld [vmem:[#allocation2 + $0x1f8] sm:$0xff]
    %116 = vmatprep.subr.mxu0 %v53
    %117 = vmatpush1.msra.mxu0 %v52
    %118 = vmatprep.subr.mxu0 %v57
    %119 = vmatpush1.msra.mxu0 %v56
    %120 = vmatprep.subr.mxu0 %v61
    %121 = vmatpush1.msra.mxu0 %v60
    %122 = vmatprep.subr.mxu0 %v65
    %123 = vmatpush1.msra.mxu0 %v64
    %124 = vmatprep.subr.mxu0 %v69
    %125 = vmatpush1.msra.mxu0 %v68
    %126 = vmatprep.subr.mxu0 %v73
    %127 = vmatpush1.msra.mxu0 %v72
    %128 = vmatprep.subr.mxu0 %v77
    %129 = vmatpush1.msra.mxu0 %v76
    %130 = vmatprep.subr.mxu0 %v81
    %131 = vmatpush1.msra.mxu0 %v80
    %132 = vmatprep.subr.mxu0 %v85
    %133 = vmatpush1.msra.mxu0 %v84
    %134 = vmatprep.subr.mxu0 %v89
    %135 = vmatpush1.msra.mxu0 %v88
    %136 = vmatprep.subr.mxu0 %v93
    %137 = vmatpush1.msra.mxu0 %v92
    %138 = vmatprep.subr.mxu0 %v97
    %139 = vmatpush1.msra.mxu0 %v96
    %140 = vmatprep.subr.mxu0 %v101
    %141 = vmatpush1.msra.mxu0 %v100
    %142 = vmatprep.subr.mxu0 %v105
    %143 = vmatpush1.msra.mxu0 %v104
    %144 = vmatprep.subr.mxu0 %v109
    %145 = vmatpush1.msra.mxu0 %v108
    %146 = vmatprep.subr.mxu0 %v113
    %147 = vmatpush1.msra.mxu0 %v112
    %148 = vmatprep.subr.mxu0 0.0
    %149 = vmatpush1.msra.mxu0 0.0
    %150 = vmatprep.subr.mxu0 0.0
    %151 = vmatpush1.msra.mxu0 0.0
    %152 = vmatprep.subr.mxu0 0.0
    %153 = vmatpush1.msra.mxu0 0.0
    %154 = vmatprep.subr.mxu0 0.0
    %155 = vmatpush1.msra.mxu0 0.0
    %156 = vmatprep.subr.mxu0 0.0
    %157 = vmatpush1.msra.mxu0 0.0
    %158 = vmatprep.subr.mxu0 0.0
    %159 = vmatpush1.msra.mxu0 0.0
    %160 = vmatprep.subr.mxu0 0.0
    %161 = vmatpush1.msra.mxu0 0.0
    %162 = vmatprep.subr.mxu0 0.0
    %163 = vmatpush1.msra.mxu0 0.0
    %164 = vmatprep.subr.mxu0 0.0
    %165 = vmatpush1.msra.mxu0 0.0
    %166 = vmatprep.subr.mxu0 0.0
    %167 = vmatpush1.msra.mxu0 0.0
    %168 = vmatprep.subr.mxu0 0.0
    %169 = vmatpush1.msra.mxu0 0.0
    %170 = vmatprep.subr.mxu0 0.0
    %171 = vmatpush1.msra.mxu0 0.0
    %172 = vmatprep.subr.mxu0 0.0
    %173 = vmatpush1.msra.mxu0 0.0
    %174 = vmatprep.subr.mxu0 0.0
    %175 = vmatpush1.msra.mxu0 0.0
    %176 = vmatprep.subr.mxu0 0.0
    %177 = vmatpush1.msra.mxu0 0.0
    %178 = vmatprep.subr.mxu0 0.0
    %179 = vmatpush1.msra.mxu0 0.0
    %180 = vmatprep.mubr.f32.mxu0 0.0
    %181 = vmatmul.mubr.f32.gmra.mrb[0].mxu0 %v49
    %v182 = vpop.f32.mrb[0].mxu0
    %v183 = vadd.f32 0.0, %v182
    %v184 = vpop.f32.mrb[0].mxu0
    %v185 = vadd.f32 0.0, %v184
    %186 = vmatprep.mubr.f32.mxu0 0.0
    %187 = vmatmul.mubr.f32.gmra.mrb[0].mxu0 %v50
    %v188 = vpop.f32.mrb[0].mxu0
    %v189 = vadd.f32 0.0, %v188
    %v190 = vpop.f32.mrb[0].mxu0
    %v191 = vadd.f32 0.0, %v190
    %192 = vmatprep.mubr.f32.mxu0 0.0
    %193 = vmatmul.mubr.f32.gmra.mrb[0].mxu0 %v51
    %v194 = vpop.f32.mrb[0].mxu0
    %v195 = vadd.f32 0.0, %v194
    %v196 = vpop.f32.mrb[0].mxu0
    %v197 = vadd.f32 0.0, %v196
    %198 = vdwg.mxu0
    %199 = vmatprep.subr.mxu0 %v55
    %200 = vmatpush1.msra.mxu0 %v54
    %201 = vmatprep.subr.mxu0 %v59
    %202 = vmatpush1.msra.mxu0 %v58
    %203 = vmatprep.subr.mxu0 %v63
    %204 = vmatpush1.msra.mxu0 %v62
    %205 = vmatprep.subr.mxu0 %v67
    %206 = vmatpush1.msra.mxu0 %v66
    %207 = vmatprep.subr.mxu0 %v71
    %208 = vmatpush1.msra.mxu0 %v70
    %209 = vmatprep.subr.mxu0 %v75
    %210 = vmatpush1.msra.mxu0 %v74
    %211 = vmatprep.subr.mxu0 %v79
    %212 = vmatpush1.msra.mxu0 %v78
    %213 = vmatprep.subr.mxu0 %v83
    %214 = vmatpush1.msra.mxu0 %v82
    %215 = vmatprep.subr.mxu0 %v87
    %216 = vmatpush1.msra.mxu0 %v86
    %217 = vmatprep.subr.mxu0 %v91
    %218 = vmatpush1.msra.mxu0 %v90
    %219 = vmatprep.subr.mxu0 %v95
    %220 = vmatpush1.msra.mxu0 %v94
    %221 = vmatprep.subr.mxu0 %v99
    %222 = vmatpush1.msra.mxu0 %v98
    %223 = vmatprep.subr.mxu0 %v103
    %224 = vmatpush1.msra.mxu0 %v102
    %225 = vmatprep.subr.mxu0 %v107
    %226 = vmatpush1.msra.mxu0 %v106
    %227 = vmatprep.subr.mxu0 %v111
    %228 = vmatpush1.msra.mxu0 %v110
    %229 = vmatprep.subr.mxu0 %v115
    %230 = vmatpush1.msra.mxu0 %v114
    %231 = vmatprep.subr.mxu0 0.0
    %232 = vmatpush1.msra.mxu0 0.0
    %233 = vmatprep.subr.mxu0 0.0
    %234 = vmatpush1.msra.mxu0 0.0
    %235 = vmatprep.subr.mxu0 0.0
    %236 = vmatpush1.msra.mxu0 0.0
    %237 = vmatprep.subr.mxu0 0.0
    %238 = vmatpush1.msra.mxu0 0.0
    %239 = vmatprep.subr.mxu0 0.0
    %240 = vmatpush1.msra.mxu0 0.0
    %241 = vmatprep.subr.mxu0 0.0
    %242 = vmatpush1.msra.mxu0 0.0
    %243 = vmatprep.subr.mxu0 0.0
    %244 = vmatpush1.msra.mxu0 0.0
    %245 = vmatprep.subr.mxu0 0.0
    %246 = vmatpush1.msra.mxu0 0.0
    %247 = vmatprep.subr.mxu0 0.0
    %248 = vmatpush1.msra.mxu0 0.0
    %249 = vmatprep.subr.mxu0 0.0
    %250 = vmatpush1.msra.mxu0 0.0
    %251 = vmatprep.subr.mxu0 0.0
    %252 = vmatpush1.msra.mxu0 0.0
    %253 = vmatprep.subr.mxu0 0.0
    %254 = vmatpush1.msra.mxu0 0.0
    %255 = vmatprep.subr.mxu0 0.0
    %256 = vmatpush1.msra.mxu0 0.0
    %257 = vmatprep.subr.mxu0 0.0
    %258 = vmatpush1.msra.mxu0 0.0
    %259 = vmatprep.subr.mxu0 0.0
    %260 = vmatpush1.msra.mxu0 0.0
    %261 = vmatprep.subr.mxu0 0.0
    %262 = vmatpush1.msra.mxu0 0.0
    %263 = vmatprep.mubr.f32.mxu0 0.0
    %264 = vmatmul.mubr.f32.gmra.mrb[0].mxu0 %v49
    %v265 = vpop.f32.mrb[0].mxu0
    %v266 = vadd.f32 0.0, %v265
    %v267 = vpop.f32.mrb[0].mxu0
    %v268 = vadd.f32 0.0, %v267
    %269 = vmatprep.mubr.f32.mxu0 0.0
    %270 = vmatmul.mubr.f32.gmra.mrb[0].mxu0 %v50
    %v271 = vpop.f32.mrb[0].mxu0
    %v272 = vadd.f32 0.0, %v271
    %v273 = vpop.f32.mrb[0].mxu0
    %v274 = vadd.f32 0.0, %v273
    %275 = vmatprep.mubr.f32.mxu0 0.0
    %276 = vmatmul.mubr.f32.gmra.mrb[0].mxu0 %v51
    %v277 = vpop.f32.mrb[0].mxu0
    %v278 = vadd.f32 0.0, %v277
    %v279 = vpop.f32.mrb[0].mxu0
    %v280 = vadd.f32 0.0, %v279
    %281 = vdwg.mxu0
    %282 = vst [vmem:[#allocation5] sm:$0xff] %v183
    %283 = vst [vmem:[#allocation5 + $0x8] sm:$0xff] %v185
    %284 = vst [vmem:[#allocation5 + $0x10] sm:$0xff] %v266
    %285 = vst [vmem:[#allocation5 + $0x18] sm:$0xff] %v268
    %286 = vst [vmem:[#allocation5 + $0x20] sm:$0xff] %v189
    %287 = vst [vmem:[#allocation5 + $0x28] sm:$0xff] %v191
    %288 = vst [vmem:[#allocation5 + $0x30] sm:$0xff] %v272
    %289 = vst [vmem:[#allocation5 + $0x38] sm:$0xff] %v274
    %290 = vst [vmem:[#allocation5 + $0x40] sm:$0xff] %v195
    %291 = vst [vmem:[#allocation5 + $0x48] sm:$0xff] %v197
    %292 = vst [vmem:[#allocation5 + $0x50] sm:$0xff] %v278
    %293 = vst [vmem:[#allocation5 + $0x58] sm:$0xff] %v280
    // Predicated region
    $region14: #{tpu_custom_call.1} parent=1 // pred_check
      _
    $region15: #{tpu_custom_call.1} parent=1 // pred_check_branch
      %295 = sbr.rel (0) target = $region17
    $region16: #{tpu_custom_call.1} parent=1 // pred_region
      %s297 = ssub.s32 1536, 1536
      %298 = vsyncadd [#allocation4], %s297
      %s299 = sshll.u32 [#allocation5], 4
      %s300 = int_to_ptr.vmem [resolvable:$true] %s299
      %305 = dma.vmem_to_hbm [thread:$0]  %s300, 1536, %s2, [#allocation4], 512, 512, 32
    $region17: #{tpu_custom_call.1} parent=1 // pred_fallthru
      _
    // Predicated region
    $region18: #{tpu_custom_call.1} parent=1 // pred_check
      _
    $region19: #{tpu_custom_call.1} parent=1 // pred_check_branch
      %307 = sbr.rel (0) target = $region21
    $region20: #{tpu_custom_call.1} parent=1 // pred_region
      %308 = dma.done [#allocation4], 1536
    $region21: #{tpu_custom_call.1} parent=1 // pred_fallthru
      _
    %309 = vsyncpa [#allocation3], 1
    %310 = vsyncpa [#allocation4], 1

</llo_original>
